<compile_context>
chip_gen: v7x
topology: tpu7x:2x2x1
jax: 0.10.0
libtpu: 0.0.40
codegen_flags: <defaults>
</compile_context>

<pallas_src>
import jax
import jax.numpy as jnp
from jax.experimental import pallas as pl
from jax.experimental.pallas import tpu as pltpu

EPS = 1e-5          # BatchNorm1d default eps
LANE = 128          # feature dims (d_main, d_hidden, d_out) padded to lane multiples
SUBLANE_F32 = 8
SUBLANE_BF16 = 16


def _round_up(n, m):
    return ((n + m - 1) // m) * m


def _pad_to(a, shape):
    return jnp.pad(a, [(0, s - d) for d, s in zip(a.shape, shape)])


def resnet_kernel(x_ref, w0_ref, b0_ref, w1_ref, b1_ref, w2_ref, b2_ref,
                  hs_ref, ht_ref, wh_ref, bh_ref, o_ref):
    cdt = w1_ref.dtype  # MXU operand dtype (bf16 fast path or f32 exact path)

    # first_layer: Linear(d_in, d_main) -- f32 accumulation, f32 bias
    h = jnp.dot(x_ref[...], w0_ref[...],
                preferred_element_type=jnp.float32) + b0_ref[...]

    n_blocks = w1_ref.shape[0]

    def block(b, h):
        # Block: BN already folded into (w1, b1); dropout is identity in eval mode.
        z = jnp.dot(h.astype(cdt), w1_ref[b],
                    preferred_element_type=jnp.float32) + b1_ref[b]
        z = jnp.maximum(z, 0.0)                                   # ReLU (f32, VPU)
        z = jnp.dot(z.astype(cdt), w2_ref[b],
                    preferred_element_type=jnp.float32) + b2_ref[b]
        return h + z                                              # skip connection (f32)

    if n_blocks <= 8:
        # static unroll: keeps weight indexing static for small block counts
        for b in range(n_blocks):
            h = block(b, h)
    else:
        # large n_blocks: bound live ranges / code size with fori_loop + dynamic index
        h = jax.lax.fori_loop(0, n_blocks, block, h)

    # Head: BN (precomputed f32 affine) -> ReLU -> Linear(d_main, d_out)
    z = jnp.maximum(h * hs_ref[...] + ht_ref[...], 0.0)
    out = jnp.dot(z.astype(cdt), wh_ref[...],
                  preferred_element_type=jnp.float32) + bh_ref[...]
    o_ref[...] = out.astype(o_ref.dtype)


def resnet_forward(x, params, *, batch_tile=512, compute_dtype=jnp.bfloat16):
    x = x.astype(jnp.float32)  # mirrors `x = x.float()`
    N, d_in = x.shape
    (w0, b0, g, be, mu, var, w1, b1, w2, b2, hg, hb, hmu, hvar, wh, bh) = params
    n_blocks, _, d_main = g.shape
    d_hidden = w1.shape[2]
    d_out = wh.shape[1]

    # ---- Fold eval-mode BatchNorm (running stats) into the linears (BEFORE padding) ----
    s = g * jax.lax.rsqrt(var + EPS)               # (n_blocks, 1, d_main)
    t = be - mu * s                                # (n_blocks, 1, d_main)
    w1f = w1 * jnp.swapaxes(s, 1, 2)               # scale rows of w1
    b1f = jnp.einsum('nij,njk->nik', t, w1) + b1   # (n_blocks, 1, d_hidden)
    # Head BN cannot fold into wh (ReLU sits in between) -> precomputed affine instead.
    hs = hg * jax.lax.rsqrt(hvar + EPS)            # (1, d_main)
    ht = hb - hmu * hs                             # (1, d_main)

    # ---- Padding: internal feature dims to lane multiples; d_in only to the sublane ----
    itemsize = jnp.dtype(compute_dtype).itemsize
    sub = SUBLANE_BF16 if itemsize == 2 else SUBLANE_F32
    d_in_p = _round_up(d_in, sub)        # thin x DMA: block keeps full (small) last dim
    d_main_p = _round_up(d_main, LANE)
    d_hidden_p = _round_up(d_hidden, LANE)
    d_out_p = _round_up(d_out, LANE)

    # ---- Batch tile: sublane multiple; >=2 grid steps when possible (v7x has 2 TCs) ----
    bt = min(batch_tile, _round_up(N, sub))
    bt = max(sub, _round_up(bt, sub))
    if _round_up(N, bt) // bt < 2 and N > sub:
        bt = max(sub, _round_up((N + 1) // 2, sub))
    N_p = _round_up(N, bt)

    # ---- Pad + cast: matmul operands -> compute_dtype; biases / BN affine stay f32 ----
    x_p = _pad_to(x, (N_p, d_in_p)).astype(compute_dtype)
    w0_p = _pad_to(w0, (d_in_p, d_main_p)).astype(compute_dtype)
    b0_p = _pad_to(b0, (1, d_main_p))
    w1_p = _pad_to(w1f, (n_blocks, d_main_p, d_hidden_p)).astype(compute_dtype)
    b1_p = _pad_to(b1f, (n_blocks, 1, d_hidden_p))
    w2_p = _pad_to(w2, (n_blocks, d_hidden_p, d_main_p)).astype(compute_dtype)
    b2_p = _pad_to(b2, (n_blocks, 1, d_main_p))
    hs_p = _pad_to(hs, (1, d_main_p))
    ht_p = _pad_to(ht, (1, d_main_p))
    wh_p = _pad_to(wh, (d_main_p, d_out_p)).astype(compute_dtype)
    bh_p = _pad_to(bh, (1, d_out_p))

    weights = (w0_p, b0_p, w1_p, b1_p, w2_p, b2_p, hs_p, ht_p, wh_p, bh_p)

    def rep_spec(a):
        # grid-invariant (whole-array) block; constant index_map -> single buffer
        nd = a.ndim
        return pl.BlockSpec(a.shape, lambda i, _nd=nd: (0,) * _nd,
                            pipeline_mode=pl.Buffered(1))

    in_specs = [pl.BlockSpec((bt, d_in_p), lambda i: (i, 0))] + [rep_spec(a) for a in weights]
    out_spec = pl.BlockSpec((bt, d_out_p), lambda i: (i, 0))

    # ---- Generation-aware VMEM budget ----
    weight_bytes = sum(int(a.size) * a.dtype.itemsize for a in weights)   # Buffered(1)
    stream_bytes = 2 * bt * d_in_p * itemsize + 2 * bt * d_out_p * 4      # double-buffered
    act_bytes = 6 * bt * max(d_main_p, d_hidden_p) * 4                    # live f32 activations
    needed = weight_bytes + stream_bytes + act_bytes
    vmem_limit = int(min(max(2 * needed, 24 << 20), 48 << 20))            # safe on v7x 64MiB/TC

    out_p = pl.pallas_call(
        resnet_kernel,
        out_shape=jax.ShapeDtypeStruct((N_p, d_out_p), jnp.float32),
        grid_spec=pl.GridSpec(
            grid=(N_p // bt,),
            in_specs=in_specs,
            out_specs=out_spec,
        ),
        compiler_params=pltpu.CompilerParams(
            dimension_semantics=("parallel",),
            vmem_limit_bytes=vmem_limit,
        ),
    )(x_p, *weights)

    return out_p[:N, :d_out]


def init_params(key, *, d_in, d_main, d_hidden, d_out, n_blocks):
    """Deterministic PyTorch-style (uniform +-1/sqrt(fan_in)) Linear init; BN at defaults."""
    keys = iter(jax.random.split(key, 64))

    def linear(fan_in, fan_out):
        bound = 1.0 / (fan_in ** 0.5)
        w = jax.random.uniform(next(keys), (fan_in, fan_out), jnp.float32, -bound, bound)
        b = jax.random.uniform(next(keys), (1, fan_out), jnp.float32, -bound, bound)
        return w, b

    w0, b0 = linear(d_in, d_main)

    w1s, b1s, w2s, b2s = [], [], [], []
    for _ in range(n_blocks):
        w1, b1 = linear(d_main, d_hidden)
        w2, b2 = linear(d_hidden, d_main)
        w1s.append(w1); b1s.append(b1); w2s.append(w2); b2s.append(b2)
    w1 = jnp.stack(w1s); b1 = jnp.stack(b1s)
    w2 = jnp.stack(w2s); b2 = jnp.stack(b2s)

    # BatchNorm1d defaults: gamma=1, beta=0, running_mean=0, running_var=1
    g = jnp.ones((n_blocks, 1, d_main), jnp.float32)
    be = jnp.zeros((n_blocks, 1, d_main), jnp.float32)
    mu = jnp.zeros((n_blocks, 1, d_main), jnp.float32)
    var = jnp.ones((n_blocks, 1, d_main), jnp.float32)

    hg = jnp.ones((1, d_main), jnp.float32)
    hb = jnp.zeros((1, d_main), jnp.float32)
    hmu = jnp.zeros((1, d_main), jnp.float32)
    hvar = jnp.ones((1, d_main), jnp.float32)

    wh, bh = linear(d_main, d_out)
    return (w0, b0, g, be, mu, var, w1, b1, w2, b2, hg, hb, hmu, hvar, wh, bh)


def resnet_ref(x, params):
    """Pure-JAX reference of the same eval-mode forward (unfolded, unpadded, f32)."""
    x = x.astype(jnp.float32)
    (w0, b0, g, be, mu, var, w1, b1, w2, b2, hg, hb, hmu, hvar, wh, bh) = params
    h = x @ w0 + b0
    for b in range(g.shape[0]):
        z = (h - mu[b]) * jax.lax.rsqrt(var[b] + EPS) * g[b] + be[b]
        z = jnp.maximum(z @ w1[b] + b1[b], 0.0)
        z = z @ w2[b] + b2[b]
        h = h + z
    z = (h - hmu) * jax.lax.rsqrt(hvar + EPS) * hg + hb
    z = jnp.maximum(z, 0.0)
    return z @ wh + bh


if __name__ == "__main__":
    # Small shapes consistent with the tabular ResNet forward.
    N, d_in, d_main, d_hidden, d_out, n_blocks = 16, 8, 32, 64, 4, 2

    key = jax.random.PRNGKey(0)
    kx, kp = jax.random.split(key)
    x = jax.random.normal(kx, (N, d_in), jnp.float32)
    params = init_params(kp, d_in=d_in, d_main=d_main, d_hidden=d_hidden,
                         d_out=d_out, n_blocks=n_blocks)

    ref = resnet_ref(x, params)

    # Exact path (f32 MXU operands): must match the reference tightly.
    out_f32 = jax.block_until_ready(resnet_forward(x, params, compute_dtype=jnp.float32))
    assert out_f32.shape == (N, d_out)
    assert jnp.allclose(out_f32, ref, atol=1e-4, rtol=1e-4), "f32 kernel mismatch vs reference"

    # Fast path (bf16 MXU operands, f32 accumulate): loosened tolerance.
    out_bf16 = jax.block_until_ready(resnet_forward(x, params))
    assert out_bf16.shape == (N, d_out)
    assert jnp.allclose(out_bf16, ref, atol=5e-2, rtol=5e-2), "bf16 kernel mismatch vs reference"

    # TODO(synk): training-mode Dropout / batch-statistics BatchNorm are not implemented
    # (kernel is the deterministic eval-mode forward).

    print("KERNEL_OK")
</pallas_src>

<mosaic_0001>
module attributes {stable_mosaic.version = 11 : i64} {
  func.func @resnet_kernel(%arg0: i32, %arg1: memref<8x8xf32, #tpu.memory_space<vmem>>, %arg2: memref<8x128xf32, #tpu.memory_space<vmem>>, %arg3: memref<1x128xf32, #tpu.memory_space<vmem>>, %arg4: memref<2x128x128xf32, #tpu.memory_space<vmem>>, %arg5: memref<2x1x128xf32, #tpu.memory_space<vmem>>, %arg6: memref<2x128x128xf32, #tpu.memory_space<vmem>>, %arg7: memref<2x1x128xf32, #tpu.memory_space<vmem>>, %arg8: memref<1x128xf32, #tpu.memory_space<vmem>>, %arg9: memref<1x128xf32, #tpu.memory_space<vmem>>, %arg10: memref<128x128xf32, #tpu.memory_space<vmem>>, %arg11: memref<1x128xf32, #tpu.memory_space<vmem>>, %arg12: memref<8x128xf32, #tpu.memory_space<vmem>>) attributes {dimension_semantics = [#tpu.dimension_semantics<parallel>], iteration_bounds = array<i64: 2>, scalar_prefetch = 0 : i64, scratch_operands = 0 : i64, tpu.core_type = #tpu.core_type<tc>, window_params = [{transform_indices = @transform_0, window_bounds = array<i64: 8, 8>}, {pipeline_mode = #tpu.pipeline_mode<synchronous>, transform_indices = @transform_1, window_bounds = array<i64: 8, 128>}, {pipeline_mode = #tpu.pipeline_mode<synchronous>, transform_indices = @transform_2, window_bounds = array<i64: 1, 128>}, {pipeline_mode = #tpu.pipeline_mode<synchronous>, transform_indices = @transform_3, window_bounds = array<i64: 2, 128, 128>}, {pipeline_mode = #tpu.pipeline_mode<synchronous>, transform_indices = @transform_4, window_bounds = array<i64: 2, 1, 128>}, {pipeline_mode = #tpu.pipeline_mode<synchronous>, transform_indices = @transform_5, window_bounds = array<i64: 2, 128, 128>}, {pipeline_mode = #tpu.pipeline_mode<synchronous>, transform_indices = @transform_6, window_bounds = array<i64: 2, 1, 128>}, {pipeline_mode = #tpu.pipeline_mode<synchronous>, transform_indices = @transform_7, window_bounds = array<i64: 1, 128>}, {pipeline_mode = #tpu.pipeline_mode<synchronous>, transform_indices = @transform_8, window_bounds = array<i64: 1, 128>}, {pipeline_mode = #tpu.pipeline_mode<synchronous>, transform_indices = @transform_9, window_bounds = array<i64: 128, 128>}, {pipeline_mode = #tpu.pipeline_mode<synchronous>, transform_indices = @transform_10, window_bounds = array<i64: 1, 128>}, {transform_indices = @transform_11, window_bounds = array<i64: 8, 128>}]} {
    %c0 = arith.constant 0 : index
    %c0_0 = arith.constant 0 : index
    %0 = vector.load %arg1[%c0, %c0_0] : memref<8x8xf32, #tpu.memory_space<vmem>>, vector<8x8xf32>
    %c0_1 = arith.constant 0 : index
    %c0_2 = arith.constant 0 : index
    %1 = vector.load %arg2[%c0_1, %c0_2] : memref<8x128xf32, #tpu.memory_space<vmem>>, vector<8x128xf32>
    %cst = arith.constant dense<0.000000e+00> : vector<8x128xf32>
    %2 = tpu.matmul %0, %1, %cst {dimension_numbers = #tpu.dot_dimension_numbers<[1], [0], [0], [1], [0, 0, 1, 1], [], []>} : vector<8x8xf32>, vector<8x128xf32>, vector<8x128xf32> -> vector<8x128xf32>
    %c0_3 = arith.constant 0 : index
    %c0_4 = arith.constant 0 : index
    %3 = vector.load %arg3[%c0_3, %c0_4] : memref<1x128xf32, #tpu.memory_space<vmem>>, vector<1x128xf32>
    %4 = vector.broadcast %3 : vector<1x128xf32> to vector<8x128xf32>
    %5 = arith.addf %2, %4 : vector<8x128xf32>
    %c0_5 = arith.constant 0 : index
    %c0_6 = arith.constant 0 : index
    %c0_7 = arith.constant 0 : index
    %6 = vector.load %arg4[%c0_5, %c0_6, %c0_7] : memref<2x128x128xf32, #tpu.memory_space<vmem>>, vector<1x128x128xf32>
    %7 = vector.shape_cast %6 : vector<1x128x128xf32> to vector<128x128xf32>
    %cst_8 = arith.constant dense<0.000000e+00> : vector<8x128xf32>
    %8 = tpu.matmul %5, %7, %cst_8 {dimension_numbers = #tpu.dot_dimension_numbers<[1], [0], [0], [1], [0, 0, 1, 1], [], []>} : vector<8x128xf32>, vector<128x128xf32>, vector<8x128xf32> -> vector<8x128xf32>
    %c0_9 = arith.constant 0 : index
    %c0_10 = arith.constant 0 : index
    %c0_11 = arith.constant 0 : index
    %9 = vector.load %arg5[%c0_9, %c0_10, %c0_11] : memref<2x1x128xf32, #tpu.memory_space<vmem>>, vector<1x1x128xf32>
    %10 = vector.shape_cast %9 : vector<1x1x128xf32> to vector<1x128xf32>
    %11 = vector.broadcast %10 : vector<1x128xf32> to vector<8x128xf32>
    %12 = arith.addf %8, %11 : vector<8x128xf32>
    %cst_12 = arith.constant 0.000000e+00 : f32
    %13 = vector.broadcast %cst_12 : f32 to vector<8x128xf32>
    %14 = arith.maximumf %12, %13 : vector<8x128xf32>
    %c0_13 = arith.constant 0 : index
    %c0_14 = arith.constant 0 : index
    %c0_15 = arith.constant 0 : index
    %15 = vector.load %arg6[%c0_13, %c0_14, %c0_15] : memref<2x128x128xf32, #tpu.memory_space<vmem>>, vector<1x128x128xf32>
    %16 = vector.shape_cast %15 : vector<1x128x128xf32> to vector<128x128xf32>
    %cst_16 = arith.constant dense<0.000000e+00> : vector<8x128xf32>
    %17 = tpu.matmul %14, %16, %cst_16 {dimension_numbers = #tpu.dot_dimension_numbers<[1], [0], [0], [1], [0, 0, 1, 1], [], []>} : vector<8x128xf32>, vector<128x128xf32>, vector<8x128xf32> -> vector<8x128xf32>
    %c0_17 = arith.constant 0 : index
    %c0_18 = arith.constant 0 : index
    %c0_19 = arith.constant 0 : index
    %18 = vector.load %arg7[%c0_17, %c0_18, %c0_19] : memref<2x1x128xf32, #tpu.memory_space<vmem>>, vector<1x1x128xf32>
    %19 = vector.shape_cast %18 : vector<1x1x128xf32> to vector<1x128xf32>
    %20 = vector.broadcast %19 : vector<1x128xf32> to vector<8x128xf32>
    %21 = arith.addf %17, %20 : vector<8x128xf32>
    %22 = arith.addf %5, %21 : vector<8x128xf32>
    %c1 = arith.constant 1 : index
    %c0_20 = arith.constant 0 : index
    %c0_21 = arith.constant 0 : index
    %23 = vector.load %arg4[%c1, %c0_20, %c0_21] : memref<2x128x128xf32, #tpu.memory_space<vmem>>, vector<1x128x128xf32>
    %24 = vector.shape_cast %23 : vector<1x128x128xf32> to vector<128x128xf32>
    %cst_22 = arith.constant dense<0.000000e+00> : vector<8x128xf32>
    %25 = tpu.matmul %22, %24, %cst_22 {dimension_numbers = #tpu.dot_dimension_numbers<[1], [0], [0], [1], [0, 0, 1, 1], [], []>} : vector<8x128xf32>, vector<128x128xf32>, vector<8x128xf32> -> vector<8x128xf32>
    %c1_23 = arith.constant 1 : index
    %c0_24 = arith.constant 0 : index
    %c0_25 = arith.constant 0 : index
    %26 = vector.load %arg5[%c1_23, %c0_24, %c0_25] : memref<2x1x128xf32, #tpu.memory_space<vmem>>, vector<1x1x128xf32>
    %27 = vector.shape_cast %26 : vector<1x1x128xf32> to vector<1x128xf32>
    %28 = vector.broadcast %27 : vector<1x128xf32> to vector<8x128xf32>
    %29 = arith.addf %25, %28 : vector<8x128xf32>
    %cst_26 = arith.constant 0.000000e+00 : f32
    %30 = vector.broadcast %cst_26 : f32 to vector<8x128xf32>
    %31 = arith.maximumf %29, %30 : vector<8x128xf32>
    %c1_27 = arith.constant 1 : index
    %c0_28 = arith.constant 0 : index
    %c0_29 = arith.constant 0 : index
    %32 = vector.load %arg6[%c1_27, %c0_28, %c0_29] : memref<2x128x128xf32, #tpu.memory_space<vmem>>, vector<1x128x128xf32>
    %33 = vector.shape_cast %32 : vector<1x128x128xf32> to vector<128x128xf32>
    %cst_30 = arith.constant dense<0.000000e+00> : vector<8x128xf32>
    %34 = tpu.matmul %31, %33, %cst_30 {dimension_numbers = #tpu.dot_dimension_numbers<[1], [0], [0], [1], [0, 0, 1, 1], [], []>} : vector<8x128xf32>, vector<128x128xf32>, vector<8x128xf32> -> vector<8x128xf32>
    %c1_31 = arith.constant 1 : index
    %c0_32 = arith.constant 0 : index
    %c0_33 = arith.constant 0 : index
    %35 = vector.load %arg7[%c1_31, %c0_32, %c0_33] : memref<2x1x128xf32, #tpu.memory_space<vmem>>, vector<1x1x128xf32>
    %36 = vector.shape_cast %35 : vector<1x1x128xf32> to vector<1x128xf32>
    %37 = vector.broadcast %36 : vector<1x128xf32> to vector<8x128xf32>
    %38 = arith.addf %34, %37 : vector<8x128xf32>
    %39 = arith.addf %22, %38 : vector<8x128xf32>
    %c0_34 = arith.constant 0 : index
    %c0_35 = arith.constant 0 : index
    %40 = vector.load %arg8[%c0_34, %c0_35] : memref<1x128xf32, #tpu.memory_space<vmem>>, vector<1x128xf32>
    %41 = vector.broadcast %40 : vector<1x128xf32> to vector<8x128xf32>
    %42 = arith.mulf %39, %41 : vector<8x128xf32>
    %c0_36 = arith.constant 0 : index
    %c0_37 = arith.constant 0 : index
    %43 = vector.load %arg9[%c0_36, %c0_37] : memref<1x128xf32, #tpu.memory_space<vmem>>, vector<1x128xf32>
    %44 = vector.broadcast %43 : vector<1x128xf32> to vector<8x128xf32>
    %45 = arith.addf %42, %44 : vector<8x128xf32>
    %cst_38 = arith.constant 0.000000e+00 : f32
    %46 = vector.broadcast %cst_38 : f32 to vector<8x128xf32>
    %47 = arith.maximumf %45, %46 : vector<8x128xf32>
    %c0_39 = arith.constant 0 : index
    %c0_40 = arith.constant 0 : index
    %48 = vector.load %arg10[%c0_39, %c0_40] : memref<128x128xf32, #tpu.memory_space<vmem>>, vector<128x128xf32>
    %cst_41 = arith.constant dense<0.000000e+00> : vector<8x128xf32>
    %49 = tpu.matmul %47, %48, %cst_41 {dimension_numbers = #tpu.dot_dimension_numbers<[1], [0], [0], [1], [0, 0, 1, 1], [], []>} : vector<8x128xf32>, vector<128x128xf32>, vector<8x128xf32> -> vector<8x128xf32>
    %c0_42 = arith.constant 0 : index
    %c0_43 = arith.constant 0 : index
    %50 = vector.load %arg11[%c0_42, %c0_43] : memref<1x128xf32, #tpu.memory_space<vmem>>, vector<1x128xf32>
    %51 = vector.broadcast %50 : vector<1x128xf32> to vector<8x128xf32>
    %52 = arith.addf %49, %51 : vector<8x128xf32>
    %c0_44 = arith.constant 0 : index
    %c0_45 = arith.constant 0 : index
    %53 = vector.load %arg12[%c0_44, %c0_45] : memref<8x128xf32, #tpu.memory_space<vmem>>, vector<8x128xf32>
    tpu.vector_store %arg12[%c0_44, %c0_45], %52 {strides = array<i32>} : memref<8x128xf32, #tpu.memory_space<vmem>>, vector<8x128xf32>,
    return
  }
  func.func @transform_0(%arg0: i32) -> (i32, i32) {
    %c0_i32 = arith.constant 0 : i32
    %c0_i32_0 = arith.constant 0 : i32
    return %arg0, %c0_i32 : i32, i32
  }
  func.func @transform_1(%arg0: i32) -> (i32, i32) {
    %c0_i32 = arith.constant 0 : i32
    %c0_i32_0 = arith.constant 0 : i32
    %c0_i32_1 = arith.constant 0 : i32
    return %c0_i32, %c0_i32_0 : i32, i32
  }
  func.func @transform_2(%arg0: i32) -> (i32, i32) {
    %c0_i32 = arith.constant 0 : i32
    %c0_i32_0 = arith.constant 0 : i32
    %c0_i32_1 = arith.constant 0 : i32
    return %c0_i32, %c0_i32_0 : i32, i32
  }
  func.func @transform_3(%arg0: i32) -> (i32, i32, i32) {
    %c0_i32 = arith.constant 0 : i32
    %c0_i32_0 = arith.constant 0 : i32
    %c0_i32_1 = arith.constant 0 : i32
    %c0_i32_2 = arith.constant 0 : i32
    return %c0_i32, %c0_i32_0, %c0_i32_1 : i32, i32, i32
  }
  func.func @transform_4(%arg0: i32) -> (i32, i32, i32) {
    %c0_i32 = arith.constant 0 : i32
    %c0_i32_0 = arith.constant 0 : i32
    %c0_i32_1 = arith.constant 0 : i32
    %c0_i32_2 = arith.constant 0 : i32
    return %c0_i32, %c0_i32_0, %c0_i32_1 : i32, i32, i32
  }
  func.func @transform_5(%arg0: i32) -> (i32, i32, i32) {
    %c0_i32 = arith.constant 0 : i32
    %c0_i32_0 = arith.constant 0 : i32
    %c0_i32_1 = arith.constant 0 : i32
    %c0_i32_2 = arith.constant 0 : i32
    return %c0_i32, %c0_i32_0, %c0_i32_1 : i32, i32, i32
  }
  func.func @transform_6(%arg0: i32) -> (i32, i32, i32) {
    %c0_i32 = arith.constant 0 : i32
    %c0_i32_0 = arith.constant 0 : i32
    %c0_i32_1 = arith.constant 0 : i32
    %c0_i32_2 = arith.constant 0 : i32
    return %c0_i32, %c0_i32_0, %c0_i32_1 : i32, i32, i32
  }
  func.func @transform_7(%arg0: i32) -> (i32, i32) {
    %c0_i32 = arith.constant 0 : i32
    %c0_i32_0 = arith.constant 0 : i32
    %c0_i32_1 = arith.constant 0 : i32
    return %c0_i32, %c0_i32_0 : i32, i32
  }
  func.func @transform_8(%arg0: i32) -> (i32, i32) {
    %c0_i32 = arith.constant 0 : i32
    %c0_i32_0 = arith.constant 0 : i32
    %c0_i32_1 = arith.constant 0 : i32
    return %c0_i32, %c0_i32_0 : i32, i32
  }
  func.func @transform_9(%arg0: i32) -> (i32, i32) {
    %c0_i32 = arith.constant 0 : i32
    %c0_i32_0 = arith.constant 0 : i32
    %c0_i32_1 = arith.constant 0 : i32
    return %c0_i32, %c0_i32_0 : i32, i32
  }
  func.func @transform_10(%arg0: i32) -> (i32, i32) {
    %c0_i32 = arith.constant 0 : i32
    %c0_i32_0 = arith.constant 0 : i32
    %c0_i32_1 = arith.constant 0 : i32
    return %c0_i32, %c0_i32_0 : i32, i32
  }
  func.func @transform_11(%arg0: i32) -> (i32, i32) {
    %c0_i32 = arith.constant 0 : i32
    %c0_i32_0 = arith.constant 0 : i32
    return %arg0, %c0_i32 : i32, i32
  }
}

</mosaic_0001>

<llo_original>
// kernel: tpu_custom_call.1
$region0: #{tpu_custom_call.1}
  #allocation0 [shape = 'u32[]', space=smem, size = 0x4, offset = 0x4, fixed_abs, tag = 'smem constant byte address 0x4 - core index']
  #allocation1 [shape = 'u32[144,128]{1,0:T(1,128)}', space=vmem, size = 0x12000, scoped, tag = 'internal scratch']
  %s0 = inlined_call_operand.vmem [shape: f32[16,8], index: 0, kind: input, shape index: {}]
  %s1 = inlined_call_operand.vmem [shape: f32[8,128], index: 1, kind: input, shape index: {}]
  %s2 = inlined_call_operand.vmem [shape: f32[1,128], index: 2, kind: input, shape index: {}]
  %s3 = inlined_call_operand.hbm [shape: f32[2,128,128], index: 3, kind: input, shape index: {}]
  %s4 = inlined_call_operand.vmem [shape: f32[2,1,128], index: 4, kind: input, shape index: {}]
  %s5 = inlined_call_operand.hbm [shape: f32[2,128,128], index: 5, kind: input, shape index: {}]
  %s6 = inlined_call_operand.vmem [shape: f32[2,1,128], index: 6, kind: input, shape index: {}]
  %s7 = inlined_call_operand.vmem [shape: f32[1,128], index: 7, kind: input, shape index: {}]
  %s8 = inlined_call_operand.vmem [shape: f32[1,128], index: 8, kind: input, shape index: {}]
  %s9 = inlined_call_operand.hbm [shape: f32[128,128], index: 9, kind: input, shape index: {}]
  %s10 = inlined_call_operand.vmem [shape: f32[1,128], index: 10, kind: input, shape index: {}]
  %s11 = inlined_call_operand.hbm [shape: f32[16,128], index: 11, kind: output, shape index: {}]
  %s12 = sld [smem:[#allocation0]]
  $region89: #{tpu_custom_call.1} parent=0
    _
  %s14 = ssub.s32 1, %s12
  %s15 = scalar_select 0, %s14, %s12
  $region1: #{tpu_custom_call.1} parent=0
    #allocation2 [shape = 'u8[131072]{0}', space=vmem, size = 0x20000, scoped, tag = 'input window, operand 3, single buffered']
    #allocation3 [shape = 's32[2]{0}', space=sflag, size = 0x8, scoped, tag = 'scoped memory for tpu_custom_call.1']
    #allocation4 [shape = 's32[2]{0}', space=sflag, size = 0x8, scoped, tag = 'scoped memory for tpu_custom_call.1']
    #allocation5 [shape = 'u8[131072]{0}', space=vmem, size = 0x20000, scoped, tag = 'input window, operand 5, single buffered']
    #allocation6 [shape = 's32[1]{0}', space=sflag, size = 0x4, scoped, tag = 'scoped memory for tpu_custom_call.1']
    #allocation7 [shape = 'u8[65536]{0}', space=vmem, size = 0x10000, scoped, tag = 'input window, operand 9, single buffered']
    #allocation8 [shape = 'u8[8192]{0}', space=vmem, size = 0x2000, scoped, tag = 'output window, operand 0']
    %16 = vsyncpa [#allocation3], 0
    %17 = vsyncpa [#allocation6], 0
    %18 = vsyncpa [#allocation4], 0
    %s19 = scalar_lea.sflag [#allocation4], 1
    %20 = vsyncpa %s19, 0
    loop: start=0, step=1, limit=4
    $region2: #{tpu_custom_call.1} parent=1 // loop_pre_header
      _
    $region3: #{tpu_custom_call.1} parent=1 // loop_header
      %s22 = sphi 0, %s26
      %p23 = scmp.ge.s32.totalorder %s22, 4
      %s32 = sphi 0, %s34
      %s35 = sphi 0, %s32
      %s36 = sphi 0, %s35
      %s52 = sphi 0, %s36
      %s56 = sphi 0, %s56
      %s58 = sphi 0, %s56
      %s59 = sphi 0, %s58
      %s73 = sphi 0, %s59
      %s77 = sphi 0, %s77
      %s79 = sphi 0, %s77
      %s80 = sphi 0, %s79
      %s94 = sphi 0, %s80
      %s98 = sphi 0, %s98
      %s100 = sphi 0, %s98
      %s101 = sphi 0, %s100
      %s115 = sphi 0, %s101
      %s119 = sphi 0, %s119
      %s121 = sphi 0, %s119
      %s122 = sphi 0, %s121
      %s136 = sphi 0, %s122
      %s140 = sphi 0, %s140
      %s142 = sphi 0, %s140
      %s143 = sphi 0, %s142
      %s157 = sphi 0, %s143
      %s161 = sphi 0, %s161
      %s163 = sphi 0, %s161
      %s164 = sphi 0, %s163
      %s178 = sphi 0, %s164
      %s182 = sphi 0, %s182
      %s184 = sphi 0, %s182
      %s185 = sphi 0, %s184
      %s199 = sphi 0, %s185
      %s203 = sphi 0, %s203
      %s205 = sphi 0, %s203
      %s206 = sphi 0, %s205
      %s220 = sphi 0, %s206
      %s224 = sphi 0, %s224
      %s226 = sphi 0, %s224
      %s227 = sphi 0, %s226
      %s241 = sphi 0, %s227
      %s245 = sphi 0, %s245
      %s247 = sphi 0, %s245
      %s248 = sphi 0, %s247
      %s262 = sphi 0, %s248
      %s268 = sphi 0, %s270
      %s271 = sphi 0, %s268
      %s272 = sphi 0, %s271
      %s288 = sphi 0, %s272
    $region4: #{tpu_custom_call.1} parent=1 // loop_header_branch
      %25 = sbr.rel (%p23) target = $region8
    $region5: #{tpu_custom_call.1} parent=1 // loop_body
      %s27 = ssub.s32 %s22, 1
      %s28 = ssub.s32 %s22, 2
      %s29 = sadd.s32 %s22, 1
      %s30 = ssub.s32 %s22, %s29
      %p31 = scmp.eq.s32.totalorder %s30, 0
      %s33 = sadd.s32 %s32, 1
      %s34 = scalar_select %p31, %s32, %s33
      %p37 = pneg %p31
      %p38 = scmp.eq.s32.totalorder %s22, 1
      %p39 = por %p37, %p38
      %p40 = scmp.ne.s32.totalorder %s32, %s35
      %p41 = scmp.eq.s32.totalorder %s22, 0
      %p42 = por %p40, %p41
      %p43 = scmp.ne.s32.totalorder %s32, %s35
      %p44 = scmp.eq.s32.totalorder %s27, 1
      %p45 = por %p43, %p44
      %p46 = scmp.ne.s32.totalorder %s35, %s36
      %p47 = scmp.eq.s32.totalorder %s27, 0
      %p48 = por %p46, %p47
      %p49 = scmp.ne.s32.totalorder %s35, %s36
      %p50 = scmp.eq.s32.totalorder %s28, 1
      %p51 = por %p49, %p50
      %p53 = scmp.ne.s32.totalorder %s36, %s52
      %p54 = scmp.eq.s32.totalorder %s28, 0
      %p55 = por %p53, %p54
      %s57 = sadd.s32 %s56, 1
      %p60 = scmp.eq.s32.totalorder %s22, 1
      %p61 = scmp.ne.s32.totalorder %s56, %s58
      %p62 = scmp.eq.s32.totalorder %s22, 0
      %p63 = por %p61, %p62
      %p64 = scmp.ne.s32.totalorder %s56, %s58
      %p65 = scmp.eq.s32.totalorder %s27, 1
      %p66 = por %p64, %p65
      %p67 = scmp.ne.s32.totalorder %s58, %s59
      %p68 = scmp.eq.s32.totalorder %s27, 0
      %p69 = por %p67, %p68
      %p70 = scmp.ne.s32.totalorder %s58, %s59
      %p71 = scmp.eq.s32.totalorder %s28, 1
      %p72 = por %p70, %p71
      %p74 = scmp.ne.s32.totalorder %s59, %s73
      %p75 = scmp.eq.s32.totalorder %s28, 0
      %p76 = por %p74, %p75
      %s78 = sadd.s32 %s77, 1
      %p81 = scmp.eq.s32.totalorder %s22, 1
      %p82 = scmp.ne.s32.totalorder %s77, %s79
      %p83 = scmp.eq.s32.totalorder %s22, 0
      %p84 = por %p82, %p83
      %p85 = scmp.ne.s32.totalorder %s77, %s79
      %p86 = scmp.eq.s32.totalorder %s27, 1
      %p87 = por %p85, %p86
      %p88 = scmp.ne.s32.totalorder %s79, %s80
      %p89 = scmp.eq.s32.totalorder %s27, 0
      %p90 = por %p88, %p89
      %p91 = scmp.ne.s32.totalorder %s79, %s80
      %p92 = scmp.eq.s32.totalorder %s28, 1
      %p93 = por %p91, %p92
      %p95 = scmp.ne.s32.totalorder %s80, %s94
      %p96 = scmp.eq.s32.totalorder %s28, 0
      %p97 = por %p95, %p96
      %s99 = sadd.s32 %s98, 1
      %p102 = scmp.eq.s32.totalorder %s22, 1
      %p103 = scmp.ne.s32.totalorder %s98, %s100
      %p104 = scmp.eq.s32.totalorder %s22, 0
      %p105 = por %p103, %p104
      %p106 = scmp.ne.s32.totalorder %s98, %s100
      %p107 = scmp.eq.s32.totalorder %s27, 1
      %p108 = por %p106, %p107
      %p109 = scmp.ne.s32.totalorder %s100, %s101
      %p110 = scmp.eq.s32.totalorder %s27, 0
      %p111 = por %p109, %p110
      %p112 = scmp.ne.s32.totalorder %s100, %s101
      %p113 = scmp.eq.s32.totalorder %s28, 1
      %p114 = por %p112, %p113
      %p116 = scmp.ne.s32.totalorder %s101, %s115
      %p117 = scmp.eq.s32.totalorder %s28, 0
      %p118 = por %p116, %p117
      %s120 = sadd.s32 %s119, 1
      %p123 = scmp.eq.s32.totalorder %s22, 1
      %p124 = scmp.ne.s32.totalorder %s119, %s121
      %p125 = scmp.eq.s32.totalorder %s22, 0
      %p126 = por %p124, %p125
      %p127 = scmp.ne.s32.totalorder %s119, %s121
      %p128 = scmp.eq.s32.totalorder %s27, 1
      %p129 = por %p127, %p128
      %p130 = scmp.ne.s32.totalorder %s121, %s122
      %p131 = scmp.eq.s32.totalorder %s27, 0
      %p132 = por %p130, %p131
      %p133 = scmp.ne.s32.totalorder %s121, %s122
      %p134 = scmp.eq.s32.totalorder %s28, 1
      %p135 = por %p133, %p134
      %p137 = scmp.ne.s32.totalorder %s122, %s136
      %p138 = scmp.eq.s32.totalorder %s28, 0
      %p139 = por %p137, %p138
      %s141 = sadd.s32 %s140, 1
      %p144 = scmp.eq.s32.totalorder %s22, 1
      %p145 = scmp.ne.s32.totalorder %s140, %s142
      %p146 = scmp.eq.s32.totalorder %s22, 0
      %p147 = por %p145, %p146
      %p148 = scmp.ne.s32.totalorder %s140, %s142
      %p149 = scmp.eq.s32.totalorder %s27, 1
      %p150 = por %p148, %p149
      %p151 = scmp.ne.s32.totalorder %s142, %s143
      %p152 = scmp.eq.s32.totalorder %s27, 0
      %p153 = por %p151, %p152
      %p154 = scmp.ne.s32.totalorder %s142, %s143
      %p155 = scmp.eq.s32.totalorder %s28, 1
      %p156 = por %p154, %p155
      %p158 = scmp.ne.s32.totalorder %s143, %s157
      %p159 = scmp.eq.s32.totalorder %s28, 0
      %p160 = por %p158, %p159
      %s162 = sadd.s32 %s161, 1
      %p165 = scmp.eq.s32.totalorder %s22, 1
      %p166 = scmp.ne.s32.totalorder %s161, %s163
      %p167 = scmp.eq.s32.totalorder %s22, 0
      %p168 = por %p166, %p167
      %p169 = scmp.ne.s32.totalorder %s161, %s163
      %p170 = scmp.eq.s32.totalorder %s27, 1
      %p171 = por %p169, %p170
      %p172 = scmp.ne.s32.totalorder %s163, %s164
      %p173 = scmp.eq.s32.totalorder %s27, 0
      %p174 = por %p172, %p173
      %p175 = scmp.ne.s32.totalorder %s163, %s164
      %p176 = scmp.eq.s32.totalorder %s28, 1
      %p177 = por %p175, %p176
      %p179 = scmp.ne.s32.totalorder %s164, %s178
      %p180 = scmp.eq.s32.totalorder %s28, 0
      %p181 = por %p179, %p180
      %s183 = sadd.s32 %s182, 1
      %p186 = scmp.eq.s32.totalorder %s22, 1
      %p187 = scmp.ne.s32.totalorder %s182, %s184
      %p188 = scmp.eq.s32.totalorder %s22, 0
      %p189 = por %p187, %p188
      %p190 = scmp.ne.s32.totalorder %s182, %s184
      %p191 = scmp.eq.s32.totalorder %s27, 1
      %p192 = por %p190, %p191
      %p193 = scmp.ne.s32.totalorder %s184, %s185
      %p194 = scmp.eq.s32.totalorder %s27, 0
      %p195 = por %p193, %p194
      %p196 = scmp.ne.s32.totalorder %s184, %s185
      %p197 = scmp.eq.s32.totalorder %s28, 1
      %p198 = por %p196, %p197
      %p200 = scmp.ne.s32.totalorder %s185, %s199
      %p201 = scmp.eq.s32.totalorder %s28, 0
      %p202 = por %p200, %p201
      %s204 = sadd.s32 %s203, 1
      %p207 = scmp.eq.s32.totalorder %s22, 1
      %p208 = scmp.ne.s32.totalorder %s203, %s205
      %p209 = scmp.eq.s32.totalorder %s22, 0
      %p210 = por %p208, %p209
      %p211 = scmp.ne.s32.totalorder %s203, %s205
      %p212 = scmp.eq.s32.totalorder %s27, 1
      %p213 = por %p211, %p212
      %p214 = scmp.ne.s32.totalorder %s205, %s206
      %p215 = scmp.eq.s32.totalorder %s27, 0
      %p216 = por %p214, %p215
      %p217 = scmp.ne.s32.totalorder %s205, %s206
      %p218 = scmp.eq.s32.totalorder %s28, 1
      %p219 = por %p217, %p218
      %p221 = scmp.ne.s32.totalorder %s206, %s220
      %p222 = scmp.eq.s32.totalorder %s28, 0
      %p223 = por %p221, %p222
      %s225 = sadd.s32 %s224, 1
      %p228 = scmp.eq.s32.totalorder %s22, 1
      %p229 = scmp.ne.s32.totalorder %s224, %s226
      %p230 = scmp.eq.s32.totalorder %s22, 0
      %p231 = por %p229, %p230
      %p232 = scmp.ne.s32.totalorder %s224, %s226
      %p233 = scmp.eq.s32.totalorder %s27, 1
      %p234 = por %p232, %p233
      %p235 = scmp.ne.s32.totalorder %s226, %s227
      %p236 = scmp.eq.s32.totalorder %s27, 0
      %p237 = por %p235, %p236
      %p238 = scmp.ne.s32.totalorder %s226, %s227
      %p239 = scmp.eq.s32.totalorder %s28, 1
      %p240 = por %p238, %p239
      %p242 = scmp.ne.s32.totalorder %s227, %s241
      %p243 = scmp.eq.s32.totalorder %s28, 0
      %p244 = por %p242, %p243
      %s246 = sadd.s32 %s245, 1
      %p249 = scmp.eq.s32.totalorder %s22, 1
      %p250 = scmp.ne.s32.totalorder %s245, %s247
      %p251 = scmp.eq.s32.totalorder %s22, 0
      %p252 = por %p250, %p251
      %p253 = scmp.ne.s32.totalorder %s245, %s247
      %p254 = scmp.eq.s32.totalorder %s27, 1
      %p255 = por %p253, %p254
      %p256 = scmp.ne.s32.totalorder %s247, %s248
      %p257 = scmp.eq.s32.totalorder %s27, 0
      %p258 = por %p256, %p257
      %p259 = scmp.ne.s32.totalorder %s247, %s248
      %p260 = scmp.eq.s32.totalorder %s28, 1
      %p261 = por %p259, %p260
      %p263 = scmp.ne.s32.totalorder %s248, %s262
      %p264 = scmp.eq.s32.totalorder %s28, 0
      %p265 = por %p263, %p264
      %s266 = ssub.s32 %s22, %s29
      %p267 = scmp.eq.s32.totalorder %s266, 0
      %s269 = sadd.s32 %s268, 1
      %s270 = scalar_select %p267, %s268, %s269
      %p273 = pneg %p267
      %p274 = scmp.eq.s32.totalorder %s22, 1
      %p275 = por %p273, %p274
      %p276 = scmp.ne.s32.totalorder %s268, %s271
      %p277 = scmp.eq.s32.totalorder %s22, 0
      %p278 = por %p276, %p277
      %p279 = scmp.ne.s32.totalorder %s268, %s271
      %p280 = scmp.eq.s32.totalorder %s27, 1
      %p281 = por %p279, %p280
      %p282 = scmp.ne.s32.totalorder %s271, %s272
      %p283 = scmp.eq.s32.totalorder %s27, 0
      %p284 = por %p282, %p283
      %p285 = scmp.ne.s32.totalorder %s271, %s272
      %p286 = scmp.eq.s32.totalorder %s28, 1
      %p287 = por %p285, %p286
      %p289 = scmp.ne.s32.totalorder %s272, %s288
      %p290 = scmp.eq.s32.totalorder %s28, 0
      %p291 = por %p289, %p290
      %p292 = scmp.le.s32.totalorder 1, %s22
      %p293 = scmp.lt.s32.totalorder %s22, 3
      %p294 = pnand %p292, %p293
      %p295 = pneg %p294
      // Predicated region
      $region9: #{tpu_custom_call.1} parent=5 // pred_check
        _
      $region10: #{tpu_custom_call.1} parent=5 // pred_check_branch
        %297 = sbr.rel (%p294) target = $region12
      $region11: #{tpu_custom_call.1} parent=5 // pred_region
        %s298 = ssub.s32 %s22, 1
        // Predicated region
        $region13: #{tpu_custom_call.1} parent=11 // pred_check
          %p299 = pneg %p69
        $region14: #{tpu_custom_call.1} parent=11 // pred_check_branch
          %301 = sbr.rel (%p299) target = $region16
        $region15: #{tpu_custom_call.1} parent=11 // pred_region
          _
        $region16: #{tpu_custom_call.1} parent=11 // pred_fallthru
          _
        // Predicated region
        $region17: #{tpu_custom_call.1} parent=11 // pred_check
          %p302 = pneg %p90
        $region18: #{tpu_custom_call.1} parent=11 // pred_check_branch
          %304 = sbr.rel (%p302) target = $region20
        $region19: #{tpu_custom_call.1} parent=11 // pred_region
          _
        $region20: #{tpu_custom_call.1} parent=11 // pred_fallthru
          _
        // Predicated region
        $region21: #{tpu_custom_call.1} parent=11 // pred_check
          %p305 = pneg %p111
        $region22: #{tpu_custom_call.1} parent=11 // pred_check_branch
          %307 = sbr.rel (%p305) target = $region24
        $region23: #{tpu_custom_call.1} parent=11 // pred_region
          %s309 = ssub.s32 4096, 4096
          %310 = vsyncadd [#allocation3], %s309
          %s311 = sshll.u32 [#allocation2], 4
          %s312 = int_to_ptr.vmem [resolvable:$true] %s311
          %317 = dma.hbm_to_vmem [thread:$0]  %s3, 4096, %s312, [#allocation3], 128, 128, 8
        $region24: #{tpu_custom_call.1} parent=11 // pred_fallthru
          _
        // Predicated region
        $region25: #{tpu_custom_call.1} parent=11 // pred_check
          %p318 = pneg %p132
        $region26: #{tpu_custom_call.1} parent=11 // pred_check_branch
          %320 = sbr.rel (%p318) target = $region28
        $region27: #{tpu_custom_call.1} parent=11 // pred_region
          _
        $region28: #{tpu_custom_call.1} parent=11 // pred_fallthru
          _
        // Predicated region
        $region29: #{tpu_custom_call.1} parent=11 // pred_check
          %p321 = pneg %p153
        $region30: #{tpu_custom_call.1} parent=11 // pred_check_branch
          %323 = sbr.rel (%p321) target = $region32
        $region31: #{tpu_custom_call.1} parent=11 // pred_region
          %s325 = ssub.s32 4096, 4096
          %326 = vsyncadd [#allocation6], %s325
          %s327 = sshll.u32 [#allocation5], 4
          %s328 = int_to_ptr.vmem [resolvable:$true] %s327
          %333 = dma.hbm_to_vmem [thread:$0]  %s5, 4096, %s328, [#allocation6], 128, 128, 8
        $region32: #{tpu_custom_call.1} parent=11 // pred_fallthru
          _
        // Predicated region
        $region33: #{tpu_custom_call.1} parent=11 // pred_check
          %p334 = pneg %p174
        $region34: #{tpu_custom_call.1} parent=11 // pred_check_branch
          %336 = sbr.rel (%p334) target = $region36
        $region35: #{tpu_custom_call.1} parent=11 // pred_region
          _
        $region36: #{tpu_custom_call.1} parent=11 // pred_fallthru
          _
        // Predicated region
        $region37: #{tpu_custom_call.1} parent=11 // pred_check
          %p337 = pneg %p195
        $region38: #{tpu_custom_call.1} parent=11 // pred_check_branch
          %339 = sbr.rel (%p337) target = $region40
        $region39: #{tpu_custom_call.1} parent=11 // pred_region
          _
        $region40: #{tpu_custom_call.1} parent=11 // pred_fallthru
          _
        // Predicated region
        $region41: #{tpu_custom_call.1} parent=11 // pred_check
          %p340 = pneg %p216
        $region42: #{tpu_custom_call.1} parent=11 // pred_check_branch
          %342 = sbr.rel (%p340) target = $region44
        $region43: #{tpu_custom_call.1} parent=11 // pred_region
          _
        $region44: #{tpu_custom_call.1} parent=11 // pred_fallthru
          _
        // Predicated region
        $region45: #{tpu_custom_call.1} parent=11 // pred_check
          %p343 = pneg %p237
        $region46: #{tpu_custom_call.1} parent=11 // pred_check_branch
          %345 = sbr.rel (%p343) target = $region48
        $region47: #{tpu_custom_call.1} parent=11 // pred_region
          %s347 = ssub.s32 2048, 2048
          %348 = vsyncadd [#allocation6], %s347
          %s349 = sshll.u32 [#allocation7], 4
          %s350 = int_to_ptr.vmem [resolvable:$true] %s349
          %355 = dma.hbm_to_vmem [thread:$0]  %s9, 2048, %s350, [#allocation6], 128, 128, 8
        $region48: #{tpu_custom_call.1} parent=11 // pred_fallthru
          _
        // Predicated region
        $region49: #{tpu_custom_call.1} parent=11 // pred_check
          %p356 = pneg %p258
        $region50: #{tpu_custom_call.1} parent=11 // pred_check_branch
          %358 = sbr.rel (%p356) target = $region52
        $region51: #{tpu_custom_call.1} parent=11 // pred_region
          _
        $region52: #{tpu_custom_call.1} parent=11 // pred_fallthru
          _
      $region12: #{tpu_custom_call.1} parent=5 // pred_fallthru
        _
      %p359 = scmp.lt.s32.totalorder %s22, 2
      // Predicated region
      $region53: #{tpu_custom_call.1} parent=5 // pred_check
        %p360 = pneg %p359
      $region54: #{tpu_custom_call.1} parent=5 // pred_check_branch
        %362 = sbr.rel (%p360) target = $region56
      $region55: #{tpu_custom_call.1} parent=5 // pred_region
        // Predicated region
        $region57: #{tpu_custom_call.1} parent=55 // pred_check
          %p363 = pneg %p42
        $region58: #{tpu_custom_call.1} parent=55 // pred_check_branch
          %365 = sbr.rel (%p363) target = $region60
        $region59: #{tpu_custom_call.1} parent=55 // pred_region
          %p366 = scmp.lt.s32.totalorder %s22, 1
          %s367 = scalar_select %p366, %s22, 1
          %s368 = smul.addr %s367, 8
          %s369 = scalar_lea.vmem %s0, %s368
        $region60: #{tpu_custom_call.1} parent=55 // pred_fallthru
          _
      $region56: #{tpu_custom_call.1} parent=5 // pred_fallthru
        _
      %p370 = scmp.le.s32.totalorder 1, %s22
      %p371 = scmp.lt.s32.totalorder %s22, 3
      %p372 = pnand %p370, %p371
      %p373 = pneg %p372
      // Predicated region
      $region61: #{tpu_custom_call.1} parent=5 // pred_check
        _
      $region62: #{tpu_custom_call.1} parent=5 // pred_check_branch
        %375 = sbr.rel (%p372) target = $region64
      $region63: #{tpu_custom_call.1} parent=5 // pred_region
        %s376 = ssub.s32 %s22, 1
        // Predicated region
        $region65: #{tpu_custom_call.1} parent=63 // pred_check
          %p377 = pneg %p111
        $region66: #{tpu_custom_call.1} parent=63 // pred_check_branch
          %379 = sbr.rel (%p377) target = $region68
        $region67: #{tpu_custom_call.1} parent=63 // pred_region
          %380 = dma.done [#allocation3], 4096
        $region68: #{tpu_custom_call.1} parent=63 // pred_fallthru
          _
        // Predicated region
        $region69: #{tpu_custom_call.1} parent=63 // pred_check
          %p381 = pneg %p153
        $region70: #{tpu_custom_call.1} parent=63 // pred_check_branch
          %383 = sbr.rel (%p381) target = $region72
        $region71: #{tpu_custom_call.1} parent=63 // pred_region
          %384 = dma.done [#allocation6], 4096
        $region72: #{tpu_custom_call.1} parent=63 // pred_fallthru
          _
        // Predicated region
        $region73: #{tpu_custom_call.1} parent=63 // pred_check
          %p385 = pneg %p237
        $region74: #{tpu_custom_call.1} parent=63 // pred_check_branch
          %387 = sbr.rel (%p385) target = $region76
        $region75: #{tpu_custom_call.1} parent=63 // pred_region
          %388 = dma.done [#allocation6], 2048
        $region76: #{tpu_custom_call.1} parent=63 // pred_fallthru
          _
        %p389 = scmp.lt.s32.totalorder %s27, 1
        %s390 = scalar_select %p389, %s27, 1
        %s391 = smul.addr %s390, 8
        %s392 = scalar_lea.vmem %s0, %s391
        %p393 = pneg %p48
        %p394 = pneg %p45
        %p395 = pneg %p69
        %p396 = pneg %p66
        %p397 = pneg %p90
        %p398 = pneg %p87
        %p399 = pneg %p111
        %p400 = pneg %p108
        %p401 = pneg %p132
        %p402 = pneg %p129
        %p403 = pneg %p153
        %p404 = pneg %p150
        %p405 = pneg %p174
        %p406 = pneg %p171
        %p407 = pneg %p195
        %p408 = pneg %p192
        %p409 = pneg %p216
        %p410 = pneg %p213
        %p411 = pneg %p237
        %p412 = pneg %p234
        %p413 = pneg %p258
        %p414 = pneg %p255
        %p415 = pneg %p284
        %p416 = pneg %p281
        %s417 = sand.u32 %s271, 1
        %s418 = scalar_lea.sflag [#allocation4], %s417
        %s419 = sand.u32 %s271, 1
        %s420 = smul.addr %s419, 8
        %s421 = scalar_lea.vmem [#allocation8], %s420
        %p422 = scmp.lt.s32.totalorder %s27, 1
        %s423 = scalar_select %p422, %s27, 1
        %s424 = smul.addr %s423, 8
        %s425 = scalar_lea.vmem %s0, %s424
        %v426 = vld [vmem:[%s425] sm:$0xff]
        %v427 = vld [vmem:[%s1] sm:$0xff]
        %v428 = vld [vmem:[%s2] sm:$0x1]
        %v430 = vlaneseq
        %v431 = vshrl.u32 %v430, 7
        %v432 = vsub.s32 0, %v431
        %v433 = vrot.slane %v428, %v432
        %vm435 = vcmask 64512
        %v437 = vsel %vm435, %v426, 0
        %439 = vmatprep.subr.mxu0 0.0
        %440 = vmatpush1.msra.mxu0 %v427
        %441 = vmatprep.subr.mxu0 0.0
        %442 = vmatpush1.msra.mxu0 0.0
        %443 = vmatprep.subr.mxu0 0.0
        %444 = vmatpush1.msra.mxu0 0.0
        %445 = vmatprep.subr.mxu0 0.0
        %446 = vmatpush1.msra.mxu0 0.0
        %447 = vmatprep.subr.mxu0 0.0
        %448 = vmatpush1.msra.mxu0 0.0
        %449 = vmatprep.subr.mxu0 0.0
        %450 = vmatpush1.msra.mxu0 0.0
        %451 = vmatprep.subr.mxu0 0.0
        %452 = vmatpush1.msra.mxu0 0.0
        %453 = vmatprep.subr.mxu0 0.0
        %454 = vmatpush1.msra.mxu0 0.0
        %455 = vmatprep.subr.mxu0 0.0
        %456 = vmatpush1.msra.mxu0 0.0
        %457 = vmatprep.subr.mxu0 0.0
        %458 = vmatpush1.msra.mxu0 0.0
        %459 = vmatprep.subr.mxu0 0.0
        %460 = vmatpush1.msra.mxu0 0.0
        %461 = vmatprep.subr.mxu0 0.0
        %462 = vmatpush1.msra.mxu0 0.0
        %463 = vmatprep.subr.mxu0 0.0
        %464 = vmatpush1.msra.mxu0 0.0
        %465 = vmatprep.subr.mxu0 0.0
        %466 = vmatpush1.msra.mxu0 0.0
        %467 = vmatprep.subr.mxu0 0.0
        %468 = vmatpush1.msra.mxu0 0.0
        %469 = vmatprep.subr.mxu0 0.0
        %470 = vmatpush1.msra.mxu0 0.0
        %471 = vmatprep.subr.mxu0 0.0
        %472 = vmatpush1.msra.mxu0 0.0
        %473 = vmatprep.subr.mxu0 0.0
        %474 = vmatpush1.msra.mxu0 0.0
        %475 = vmatprep.subr.mxu0 0.0
        %476 = vmatpush1.msra.mxu0 0.0
        %477 = vmatprep.subr.mxu0 0.0
        %478 = vmatpush1.msra.mxu0 0.0
        %479 = vmatprep.subr.mxu0 0.0
        %480 = vmatpush1.msra.mxu0 0.0
        %481 = vmatprep.subr.mxu0 0.0
        %482 = vmatpush1.msra.mxu0 0.0
        %483 = vmatprep.subr.mxu0 0.0
        %484 = vmatpush1.msra.mxu0 0.0
        %485 = vmatprep.subr.mxu0 0.0
        %486 = vmatpush1.msra.mxu0 0.0
        %487 = vmatprep.subr.mxu0 0.0
        %488 = vmatpush1.msra.mxu0 0.0
        %489 = vmatprep.subr.mxu0 0.0
        %490 = vmatpush1.msra.mxu0 0.0
        %491 = vmatprep.subr.mxu0 0.0
        %492 = vmatpush1.msra.mxu0 0.0
        %493 = vmatprep.subr.mxu0 0.0
        %494 = vmatpush1.msra.mxu0 0.0
        %495 = vmatprep.subr.mxu0 0.0
        %496 = vmatpush1.msra.mxu0 0.0
        %497 = vmatprep.subr.mxu0 0.0
        %498 = vmatpush1.msra.mxu0 0.0
        %499 = vmatprep.subr.mxu0 0.0
        %500 = vmatpush1.msra.mxu0 0.0
        %501 = vmatprep.subr.mxu0 0.0
        %502 = vmatpush1.msra.mxu0 0.0
        %503 = vmatprep.mubr.f32.mxu0 0.0
        %504 = vmatmul.mubr.f32.gmra.mrb[0].mxu0 %v437
        %v505 = vpop.f32.mrb[0].mxu0
        %v506 = vadd.f32 %v433, %v505
        %v507 = vpop.f32.mrb[0].mxu0
        %508 = vdwg.mxu0
        %v509 = vld [vmem:[#allocation2] sm:$0xff]
        %v510 = vld [vmem:[#allocation2 + $0x8] sm:$0xff]
        %v511 = vld [vmem:[#allocation2 + $0x10] sm:$0xff]
        %v512 = vld [vmem:[#allocation2 + $0x18] sm:$0xff]
        %v513 = vld [vmem:[#allocation2 + $0x20] sm:$0xff]
        %v514 = vld [vmem:[#allocation2 + $0x28] sm:$0xff]
        %v515 = vld [vmem:[#allocation2 + $0x30] sm:$0xff]
        %v516 = vld [vmem:[#allocation2 + $0x38] sm:$0xff]
        %v517 = vld [vmem:[#allocation2 + $0x40] sm:$0xff]
        %v518 = vld [vmem:[#allocation2 + $0x48] sm:$0xff]
        %v519 = vld [vmem:[#allocation2 + $0x50] sm:$0xff]
        %v520 = vld [vmem:[#allocation2 + $0x58] sm:$0xff]
        %v521 = vld [vmem:[#allocation2 + $0x60] sm:$0xff]
        %v522 = vld [vmem:[#allocation2 + $0x68] sm:$0xff]
        %v523 = vld [vmem:[#allocation2 + $0x70] sm:$0xff]
        %v524 = vld [vmem:[#allocation2 + $0x78] sm:$0xff]
        %v525 = vld [vmem:[%s4] sm:$0x1]
        %v527 = vlaneseq
        %v528 = vshrl.u32 %v527, 7
        %v529 = vsub.s32 0, %v528
        %v530 = vrot.slane %v525, %v529
        %532 = vmatprep.subr.mxu0 0.0
        %533 = vmatpush1.msra.mxu0 %v509
        %534 = vmatprep.subr.mxu0 0.0
        %535 = vmatpush1.msra.mxu0 %v510
        %536 = vmatprep.subr.mxu0 0.0
        %537 = vmatpush1.msra.mxu0 %v511
        %538 = vmatprep.subr.mxu0 0.0
        %539 = vmatpush1.msra.mxu0 %v512
        %540 = vmatprep.subr.mxu0 0.0
        %541 = vmatpush1.msra.mxu0 %v513
        %542 = vmatprep.subr.mxu0 0.0
        %543 = vmatpush1.msra.mxu0 %v514
        %544 = vmatprep.subr.mxu0 0.0
        %545 = vmatpush1.msra.mxu0 %v515
        %546 = vmatprep.subr.mxu0 0.0
        %547 = vmatpush1.msra.mxu0 %v516
        %548 = vmatprep.subr.mxu0 0.0
        %549 = vmatpush1.msra.mxu0 %v517
        %550 = vmatprep.subr.mxu0 0.0
        %551 = vmatpush1.msra.mxu0 %v518
        %552 = vmatprep.subr.mxu0 0.0
        %553 = vmatpush1.msra.mxu0 %v519
        %554 = vmatprep.subr.mxu0 0.0
        %555 = vmatpush1.msra.mxu0 %v520
        %556 = vmatprep.subr.mxu0 0.0
        %557 = vmatpush1.msra.mxu0 %v521
        %558 = vmatprep.subr.mxu0 0.0
        %559 = vmatpush1.msra.mxu0 %v522
        %560 = vmatprep.subr.mxu0 0.0
        %561 = vmatpush1.msra.mxu0 %v523
        %562 = vmatprep.subr.mxu0 0.0
        %563 = vmatpush1.msra.mxu0 %v524
        %564 = vmatprep.subr.mxu0 0.0
        %565 = vmatpush1.msra.mxu0 0.0
        %566 = vmatprep.subr.mxu0 0.0
        %567 = vmatpush1.msra.mxu0 0.0
        %568 = vmatprep.subr.mxu0 0.0
        %569 = vmatpush1.msra.mxu0 0.0
        %570 = vmatprep.subr.mxu0 0.0
        %571 = vmatpush1.msra.mxu0 0.0
        %572 = vmatprep.subr.mxu0 0.0
        %573 = vmatpush1.msra.mxu0 0.0
        %574 = vmatprep.subr.mxu0 0.0
        %575 = vmatpush1.msra.mxu0 0.0
        %576 = vmatprep.subr.mxu0 0.0
        %577 = vmatpush1.msra.mxu0 0.0
        %578 = vmatprep.subr.mxu0 0.0
        %579 = vmatpush1.msra.mxu0 0.0
        %580 = vmatprep.subr.mxu0 0.0
        %581 = vmatpush1.msra.mxu0 0.0
        %582 = vmatprep.subr.mxu0 0.0
        %583 = vmatpush1.msra.mxu0 0.0
        %584 = vmatprep.subr.mxu0 0.0
        %585 = vmatpush1.msra.mxu0 0.0
        %586 = vmatprep.subr.mxu0 0.0
        %587 = vmatpush1.msra.mxu0 0.0
        %588 = vmatprep.subr.mxu0 0.0
        %589 = vmatpush1.msra.mxu0 0.0
        %590 = vmatprep.subr.mxu0 0.0
        %591 = vmatpush1.msra.mxu0 0.0
        %592 = vmatprep.subr.mxu0 0.0
        %593 = vmatpush1.msra.mxu0 0.0
        %594 = vmatprep.subr.mxu0 0.0
        %595 = vmatpush1.msra.mxu0 0.0
        %596 = vmatprep.mubr.f32.mxu0 0.0
        %597 = vmatmul.mubr.f32.gmra.mrb[0].mxu0 %v506
        %v598 = vpop.f32.mrb[0].mxu0
        %v599 = vadd.f32 %v530, %v598
        %v600 = vpop.f32.mrb[0].mxu0
        %601 = vdwg.mxu0
        %v602 = vmax.f32 %v599, 0.0
        %v603 = vld [vmem:[#allocation5] sm:$0xff]
        %v604 = vld [vmem:[#allocation5 + $0x8] sm:$0xff]
        %v605 = vld [vmem:[#allocation5 + $0x10] sm:$0xff]
        %v606 = vld [vmem:[#allocation5 + $0x18] sm:$0xff]
        %v607 = vld [vmem:[#allocation5 + $0x20] sm:$0xff]
        %v608 = vld [vmem:[#allocation5 + $0x28] sm:$0xff]
        %v609 = vld [vmem:[#allocation5 + $0x30] sm:$0xff]
        %v610 = vld [vmem:[#allocation5 + $0x38] sm:$0xff]
        %v611 = vld [vmem:[#allocation5 + $0x40] sm:$0xff]
        %v612 = vld [vmem:[#allocation5 + $0x48] sm:$0xff]
        %v613 = vld [vmem:[#allocation5 + $0x50] sm:$0xff]
        %v614 = vld [vmem:[#allocation5 + $0x58] sm:$0xff]
        %v615 = vld [vmem:[#allocation5 + $0x60] sm:$0xff]
        %v616 = vld [vmem:[#allocation5 + $0x68] sm:$0xff]
        %v617 = vld [vmem:[#allocation5 + $0x70] sm:$0xff]
        %v618 = vld [vmem:[#allocation5 + $0x78] sm:$0xff]
        %v619 = vld [vmem:[%s6] sm:$0x1]
        %v621 = vlaneseq
        %v622 = vshrl.u32 %v621, 7
        %v623 = vsub.s32 0, %v622
        %v624 = vrot.slane %v619, %v623
        %626 = vmatprep.subr.mxu0 0.0
        %627 = vmatpush1.msra.mxu0 %v603
        %628 = vmatprep.subr.mxu0 0.0
        %629 = vmatpush1.msra.mxu0 %v604
        %630 = vmatprep.subr.mxu0 0.0
        %631 = vmatpush1.msra.mxu0 %v605
        %632 = vmatprep.subr.mxu0 0.0
        %633 = vmatpush1.msra.mxu0 %v606
        %634 = vmatprep.subr.mxu0 0.0
        %635 = vmatpush1.msra.mxu0 %v607
        %636 = vmatprep.subr.mxu0 0.0
        %637 = vmatpush1.msra.mxu0 %v608
        %638 = vmatprep.subr.mxu0 0.0
        %639 = vmatpush1.msra.mxu0 %v609
        %640 = vmatprep.subr.mxu0 0.0
        %641 = vmatpush1.msra.mxu0 %v610
        %642 = vmatprep.subr.mxu0 0.0
        %643 = vmatpush1.msra.mxu0 %v611
        %644 = vmatprep.subr.mxu0 0.0
        %645 = vmatpush1.msra.mxu0 %v612
        %646 = vmatprep.subr.mxu0 0.0
        %647 = vmatpush1.msra.mxu0 %v613
        %648 = vmatprep.subr.mxu0 0.0
        %649 = vmatpush1.msra.mxu0 %v614
        %650 = vmatprep.subr.mxu0 0.0
        %651 = vmatpush1.msra.mxu0 %v615
        %652 = vmatprep.subr.mxu0 0.0
        %653 = vmatpush1.msra.mxu0 %v616
        %654 = vmatprep.subr.mxu0 0.0
        %655 = vmatpush1.msra.mxu0 %v617
        %656 = vmatprep.subr.mxu0 0.0
        %657 = vmatpush1.msra.mxu0 %v618
        %658 = vmatprep.subr.mxu0 0.0
        %659 = vmatpush1.msra.mxu0 0.0
        %660 = vmatprep.subr.mxu0 0.0
        %661 = vmatpush1.msra.mxu0 0.0
        %662 = vmatprep.subr.mxu0 0.0
        %663 = vmatpush1.msra.mxu0 0.0
        %664 = vmatprep.subr.mxu0 0.0
        %665 = vmatpush1.msra.mxu0 0.0
        %666 = vmatprep.subr.mxu0 0.0
        %667 = vmatpush1.msra.mxu0 0.0
        %668 = vmatprep.subr.mxu0 0.0
        %669 = vmatpush1.msra.mxu0 0.0
        %670 = vmatprep.subr.mxu0 0.0
        %671 = vmatpush1.msra.mxu0 0.0
        %672 = vmatprep.subr.mxu0 0.0
        %673 = vmatpush1.msra.mxu0 0.0
        %674 = vmatprep.subr.mxu0 0.0
        %675 = vmatpush1.msra.mxu0 0.0
        %676 = vmatprep.subr.mxu0 0.0
        %677 = vmatpush1.msra.mxu0 0.0
        %678 = vmatprep.subr.mxu0 0.0
        %679 = vmatpush1.msra.mxu0 0.0
        %680 = vmatprep.subr.mxu0 0.0
        %681 = vmatpush1.msra.mxu0 0.0
        %682 = vmatprep.subr.mxu0 0.0
        %683 = vmatpush1.msra.mxu0 0.0
        %684 = vmatprep.subr.mxu0 0.0
        %685 = vmatpush1.msra.mxu0 0.0
        %686 = vmatprep.subr.mxu0 0.0
        %687 = vmatpush1.msra.mxu0 0.0
        %688 = vmatprep.subr.mxu0 0.0
        %689 = vmatpush1.msra.mxu0 0.0
        %690 = vmatprep.mubr.f32.mxu0 0.0
        %691 = vmatmul.mubr.f32.gmra.mrb[0].mxu0 %v602
        %v692 = vpop.f32.mrb[0].mxu0
        %v693 = vadd.f32 %v624, %v692
        %v694 = vpop.f32.mrb[0].mxu0
        %695 = vdwg.mxu0
        %v696 = vadd.f32 %v506, %v693
        %s697 = scalar_lea.vmem [#allocation2], 128
        %v698 = vld [vmem:[%s697] sm:$0xff]
        %v699 = vld [vmem:[%s697 + $0x8] sm:$0xff]
        %v700 = vld [vmem:[%s697 + $0x10] sm:$0xff]
        %v701 = vld [vmem:[%s697 + $0x18] sm:$0xff]
        %v702 = vld [vmem:[%s697 + $0x20] sm:$0xff]
        %v703 = vld [vmem:[%s697 + $0x28] sm:$0xff]
        %v704 = vld [vmem:[%s697 + $0x30] sm:$0xff]
        %v705 = vld [vmem:[%s697 + $0x38] sm:$0xff]
        %v706 = vld [vmem:[%s697 + $0x40] sm:$0xff]
        %v707 = vld [vmem:[%s697 + $0x48] sm:$0xff]
        %v708 = vld [vmem:[%s697 + $0x50] sm:$0xff]
        %v709 = vld [vmem:[%s697 + $0x58] sm:$0xff]
        %v710 = vld [vmem:[%s697 + $0x60] sm:$0xff]
        %v711 = vld [vmem:[%s697 + $0x68] sm:$0xff]
        %v712 = vld [vmem:[%s697 + $0x70] sm:$0xff]
        %v713 = vld [vmem:[%s697 + $0x78] sm:$0xff]
        %s714 = scalar_lea.vmem %s4, 1
        %v715 = vld [vmem:[%s714] sm:$0x1]
        %v717 = vlaneseq
        %v718 = vshrl.u32 %v717, 7
        %v719 = vsub.s32 0, %v718
        %v720 = vrot.slane %v715, %v719
        %722 = vmatprep.subr.mxu0 0.0
        %723 = vmatpush1.msra.mxu0 %v698
        %724 = vmatprep.subr.mxu0 0.0
        %725 = vmatpush1.msra.mxu0 %v699
        %726 = vmatprep.subr.mxu0 0.0
        %727 = vmatpush1.msra.mxu0 %v700
        %728 = vmatprep.subr.mxu0 0.0
        %729 = vmatpush1.msra.mxu0 %v701
        %730 = vmatprep.subr.mxu0 0.0
        %731 = vmatpush1.msra.mxu0 %v702
        %732 = vmatprep.subr.mxu0 0.0
        %733 = vmatpush1.msra.mxu0 %v703
        %734 = vmatprep.subr.mxu0 0.0
        %735 = vmatpush1.msra.mxu0 %v704
        %736 = vmatprep.subr.mxu0 0.0
        %737 = vmatpush1.msra.mxu0 %v705
        %738 = vmatprep.subr.mxu0 0.0
        %739 = vmatpush1.msra.mxu0 %v706
        %740 = vmatprep.subr.mxu0 0.0
        %741 = vmatpush1.msra.mxu0 %v707
        %742 = vmatprep.subr.mxu0 0.0
        %743 = vmatpush1.msra.mxu0 %v708
        %744 = vmatprep.subr.mxu0 0.0
        %745 = vmatpush1.msra.mxu0 %v709
        %746 = vmatprep.subr.mxu0 0.0
        %747 = vmatpush1.msra.mxu0 %v710
        %748 = vmatprep.subr.mxu0 0.0
        %749 = vmatpush1.msra.mxu0 %v711
        %750 = vmatprep.subr.mxu0 0.0
        %751 = vmatpush1.msra.mxu0 %v712
        %752 = vmatprep.subr.mxu0 0.0
        %753 = vmatpush1.msra.mxu0 %v713
        %754 = vmatprep.subr.mxu0 0.0
        %755 = vmatpush1.msra.mxu0 0.0
        %756 = vmatprep.subr.mxu0 0.0
        %757 = vmatpush1.msra.mxu0 0.0
        %758 = vmatprep.subr.mxu0 0.0
        %759 = vmatpush1.msra.mxu0 0.0
        %760 = vmatprep.subr.mxu0 0.0
        %761 = vmatpush1.msra.mxu0 0.0
        %762 = vmatprep.subr.mxu0 0.0
        %763 = vmatpush1.msra.mxu0 0.0
        %764 = vmatprep.subr.mxu0 0.0
        %765 = vmatpush1.msra.mxu0 0.0
        %766 = vmatprep.subr.mxu0 0.0
        %767 = vmatpush1.msra.mxu0 0.0
        %768 = vmatprep.subr.mxu0 0.0
        %769 = vmatpush1.msra.mxu0 0.0
        %770 = vmatprep.subr.mxu0 0.0
        %771 = vmatpush1.msra.mxu0 0.0
        %772 = vmatprep.subr.mxu0 0.0
        %773 = vmatpush1.msra.mxu0 0.0
        %774 = vmatprep.subr.mxu0 0.0
        %775 = vmatpush1.msra.mxu0 0.0
        %776 = vmatprep.subr.mxu0 0.0
        %777 = vmatpush1.msra.mxu0 0.0
        %778 = vmatprep.subr.mxu0 0.0
        %779 = vmatpush1.msra.mxu0 0.0
        %780 = vmatprep.subr.mxu0 0.0
        %781 = vmatpush1.msra.mxu0 0.0
        %782 = vmatprep.subr.mxu0 0.0
        %783 = vmatpush1.msra.mxu0 0.0
        %784 = vmatprep.subr.mxu0 0.0
        %785 = vmatpush1.msra.mxu0 0.0
        %786 = vmatprep.mubr.f32.mxu0 0.0
        %787 = vmatmul.mubr.f32.gmra.mrb[0].mxu0 %v696
        %v788 = vpop.f32.mrb[0].mxu0
        %v789 = vadd.f32 %v720, %v788
        %v790 = vpop.f32.mrb[0].mxu0
        %791 = vdwg.mxu0
        %v792 = vmax.f32 %v789, 0.0
        %s793 = scalar_lea.vmem [#allocation5], 128
        %v794 = vld [vmem:[%s793] sm:$0xff]
        %v795 = vld [vmem:[%s793 + $0x8] sm:$0xff]
        %v796 = vld [vmem:[%s793 + $0x10] sm:$0xff]
        %v797 = vld [vmem:[%s793 + $0x18] sm:$0xff]
        %v798 = vld [vmem:[%s793 + $0x20] sm:$0xff]
        %v799 = vld [vmem:[%s793 + $0x28] sm:$0xff]
        %v800 = vld [vmem:[%s793 + $0x30] sm:$0xff]
        %v801 = vld [vmem:[%s793 + $0x38] sm:$0xff]
        %v802 = vld [vmem:[%s793 + $0x40] sm:$0xff]
        %v803 = vld [vmem:[%s793 + $0x48] sm:$0xff]
        %v804 = vld [vmem:[%s793 + $0x50] sm:$0xff]
        %v805 = vld [vmem:[%s793 + $0x58] sm:$0xff]
        %v806 = vld [vmem:[%s793 + $0x60] sm:$0xff]
        %v807 = vld [vmem:[%s793 + $0x68] sm:$0xff]
        %v808 = vld [vmem:[%s793 + $0x70] sm:$0xff]
        %v809 = vld [vmem:[%s793 + $0x78] sm:$0xff]
        %s810 = scalar_lea.vmem %s6, 1
        %v811 = vld [vmem:[%s810] sm:$0x1]
        %v813 = vlaneseq
        %v814 = vshrl.u32 %v813, 7
        %v815 = vsub.s32 0, %v814
        %v816 = vrot.slane %v811, %v815
        %818 = vmatprep.subr.mxu0 0.0
        %819 = vmatpush1.msra.mxu0 %v794
        %820 = vmatprep.subr.mxu0 0.0
        %821 = vmatpush1.msra.mxu0 %v795
        %822 = vmatprep.subr.mxu0 0.0
        %823 = vmatpush1.msra.mxu0 %v796
        %824 = vmatprep.subr.mxu0 0.0
        %825 = vmatpush1.msra.mxu0 %v797
        %826 = vmatprep.subr.mxu0 0.0
        %827 = vmatpush1.msra.mxu0 %v798
        %828 = vmatprep.subr.mxu0 0.0
        %829 = vmatpush1.msra.mxu0 %v799
        %830 = vmatprep.subr.mxu0 0.0
        %831 = vmatpush1.msra.mxu0 %v800
        %832 = vmatprep.subr.mxu0 0.0
        %833 = vmatpush1.msra.mxu0 %v801
        %834 = vmatprep.subr.mxu0 0.0
        %835 = vmatpush1.msra.mxu0 %v802
        %836 = vmatprep.subr.mxu0 0.0
        %837 = vmatpush1.msra.mxu0 %v803
        %838 = vmatprep.subr.mxu0 0.0
        %839 = vmatpush1.msra.mxu0 %v804
        %840 = vmatprep.subr.mxu0 0.0
        %841 = vmatpush1.msra.mxu0 %v805
        %842 = vmatprep.subr.mxu0 0.0
        %843 = vmatpush1.msra.mxu0 %v806
        %844 = vmatprep.subr.mxu0 0.0
        %845 = vmatpush1.msra.mxu0 %v807
        %846 = vmatprep.subr.mxu0 0.0
        %847 = vmatpush1.msra.mxu0 %v808
        %848 = vmatprep.subr.mxu0 0.0
        %849 = vmatpush1.msra.mxu0 %v809
        %850 = vmatprep.subr.mxu0 0.0
        %851 = vmatpush1.msra.mxu0 0.0
        %852 = vmatprep.subr.mxu0 0.0
        %853 = vmatpush1.msra.mxu0 0.0
        %854 = vmatprep.subr.mxu0 0.0
        %855 = vmatpush1.msra.mxu0 0.0
        %856 = vmatprep.subr.mxu0 0.0
        %857 = vmatpush1.msra.mxu0 0.0
        %858 = vmatprep.subr.mxu0 0.0
        %859 = vmatpush1.msra.mxu0 0.0
        %860 = vmatprep.subr.mxu0 0.0
        %861 = vmatpush1.msra.mxu0 0.0
        %862 = vmatprep.subr.mxu0 0.0
        %863 = vmatpush1.msra.mxu0 0.0
        %864 = vmatprep.subr.mxu0 0.0
        %865 = vmatpush1.msra.mxu0 0.0
        %866 = vmatprep.subr.mxu0 0.0
        %867 = vmatpush1.msra.mxu0 0.0
        %868 = vmatprep.subr.mxu0 0.0
        %869 = vmatpush1.msra.mxu0 0.0
        %870 = vmatprep.subr.mxu0 0.0
        %871 = vmatpush1.msra.mxu0 0.0
        %872 = vmatprep.subr.mxu0 0.0
        %873 = vmatpush1.msra.mxu0 0.0
        %874 = vmatprep.subr.mxu0 0.0
        %875 = vmatpush1.msra.mxu0 0.0
        %876 = vmatprep.subr.mxu0 0.0
        %877 = vmatpush1.msra.mxu0 0.0
        %878 = vmatprep.subr.mxu0 0.0
        %879 = vmatpush1.msra.mxu0 0.0
        %880 = vmatprep.subr.mxu0 0.0
        %881 = vmatpush1.msra.mxu0 0.0
        %882 = vmatprep.mubr.f32.mxu0 0.0
        %883 = vmatmul.mubr.f32.gmra.mrb[0].mxu0 %v792
        %v884 = vpop.f32.mrb[0].mxu0
        %v885 = vadd.f32 %v816, %v884
        %v886 = vpop.f32.mrb[0].mxu0
        %887 = vdwg.mxu0
        %v888 = vadd.f32 %v696, %v885
        %v889 = vld [vmem:[%s7] sm:$0x1]
        %v891 = vlaneseq
        %v892 = vshrl.u32 %v891, 7
        %v893 = vsub.s32 0, %v892
        %v894 = vrot.slane %v889, %v893
        %v896 = vmul.f32 %v888, %v894
        %v897 = vld [vmem:[%s8] sm:$0x1]
        %v899 = vlaneseq
        %v900 = vshrl.u32 %v899, 7
        %v901 = vsub.s32 0, %v900
        %v902 = vrot.slane %v897, %v901
        %v904 = vadd.f32 %v896, %v902
        %v905 = vmax.f32 %v904, 0.0
        %v906 = vld [vmem:[#allocation7] sm:$0xff]
        %v907 = vld [vmem:[#allocation7 + $0x8] sm:$0xff]
        %v908 = vld [vmem:[#allocation7 + $0x10] sm:$0xff]
        %v909 = vld [vmem:[#allocation7 + $0x18] sm:$0xff]
        %v910 = vld [vmem:[#allocation7 + $0x20] sm:$0xff]
        %v911 = vld [vmem:[#allocation7 + $0x28] sm:$0xff]
        %v912 = vld [vmem:[#allocation7 + $0x30] sm:$0xff]
        %v913 = vld [vmem:[#allocation7 + $0x38] sm:$0xff]
        %v914 = vld [vmem:[#allocation7 + $0x40] sm:$0xff]
        %v915 = vld [vmem:[#allocation7 + $0x48] sm:$0xff]
        %v916 = vld [vmem:[#allocation7 + $0x50] sm:$0xff]
        %v917 = vld [vmem:[#allocation7 + $0x58] sm:$0xff]
        %v918 = vld [vmem:[#allocation7 + $0x60] sm:$0xff]
        %v919 = vld [vmem:[#allocation7 + $0x68] sm:$0xff]
        %v920 = vld [vmem:[#allocation7 + $0x70] sm:$0xff]
        %v921 = vld [vmem:[#allocation7 + $0x78] sm:$0xff]
        %v922 = vld [vmem:[%s10] sm:$0x1]
        %v924 = vlaneseq
        %v925 = vshrl.u32 %v924, 7
        %v926 = vsub.s32 0, %v925
        %v927 = vrot.slane %v922, %v926
        %929 = vmatprep.subr.mxu0 0.0
        %930 = vmatpush1.msra.mxu0 %v906
        %931 = vmatprep.subr.mxu0 0.0
        %932 = vmatpush1.msra.mxu0 %v907
        %933 = vmatprep.subr.mxu0 0.0
        %934 = vmatpush1.msra.mxu0 %v908
        %935 = vmatprep.subr.mxu0 0.0
        %936 = vmatpush1.msra.mxu0 %v909
        %937 = vmatprep.subr.mxu0 0.0
        %938 = vmatpush1.msra.mxu0 %v910
        %939 = vmatprep.subr.mxu0 0.0
        %940 = vmatpush1.msra.mxu0 %v911
        %941 = vmatprep.subr.mxu0 0.0
        %942 = vmatpush1.msra.mxu0 %v912
        %943 = vmatprep.subr.mxu0 0.0
        %944 = vmatpush1.msra.mxu0 %v913
        %945 = vmatprep.subr.mxu0 0.0
        %946 = vmatpush1.msra.mxu0 %v914
        %947 = vmatprep.subr.mxu0 0.0
        %948 = vmatpush1.msra.mxu0 %v915
        %949 = vmatprep.subr.mxu0 0.0
        %950 = vmatpush1.msra.mxu0 %v916
        %951 = vmatprep.subr.mxu0 0.0
        %952 = vmatpush1.msra.mxu0 %v917
        %953 = vmatprep.subr.mxu0 0.0
        %954 = vmatpush1.msra.mxu0 %v918
        %955 = vmatprep.subr.mxu0 0.0
        %956 = vmatpush1.msra.mxu0 %v919
        %957 = vmatprep.subr.mxu0 0.0
        %958 = vmatpush1.msra.mxu0 %v920
        %959 = vmatprep.subr.mxu0 0.0
        %960 = vmatpush1.msra.mxu0 %v921
        %961 = vmatprep.subr.mxu0 0.0
        %962 = vmatpush1.msra.mxu0 0.0
        %963 = vmatprep.subr.mxu0 0.0
        %964 = vmatpush1.msra.mxu0 0.0
        %965 = vmatprep.subr.mxu0 0.0
        %966 = vmatpush1.msra.mxu0 0.0
        %967 = vmatprep.subr.mxu0 0.0
        %968 = vmatpush1.msra.mxu0 0.0
        %969 = vmatprep.subr.mxu0 0.0
        %970 = vmatpush1.msra.mxu0 0.0
        %971 = vmatprep.subr.mxu0 0.0
        %972 = vmatpush1.msra.mxu0 0.0
        %973 = vmatprep.subr.mxu0 0.0
        %974 = vmatpush1.msra.mxu0 0.0
        %975 = vmatprep.subr.mxu0 0.0
        %976 = vmatpush1.msra.mxu0 0.0
        %977 = vmatprep.subr.mxu0 0.0
        %978 = vmatpush1.msra.mxu0 0.0
        %979 = vmatprep.subr.mxu0 0.0
        %980 = vmatpush1.msra.mxu0 0.0
        %981 = vmatprep.subr.mxu0 0.0
        %982 = vmatpush1.msra.mxu0 0.0
        %983 = vmatprep.subr.mxu0 0.0
        %984 = vmatpush1.msra.mxu0 0.0
        %985 = vmatprep.subr.mxu0 0.0
        %986 = vmatpush1.msra.mxu0 0.0
        %987 = vmatprep.subr.mxu0 0.0
        %988 = vmatpush1.msra.mxu0 0.0
        %989 = vmatprep.subr.mxu0 0.0
        %990 = vmatpush1.msra.mxu0 0.0
        %991 = vmatprep.subr.mxu0 0.0
        %992 = vmatpush1.msra.mxu0 0.0
        %993 = vmatprep.mubr.f32.mxu0 0.0
        %994 = vmatmul.mubr.f32.gmra.mrb[0].mxu0 %v905
        %v995 = vpop.f32.mrb[0].mxu0
        %v996 = vadd.f32 %v927, %v995
        %v997 = vpop.f32.mrb[0].mxu0
        %998 = vdwg.mxu0
        %999 = vst [vmem:[%s421] sm:$0xff] %v996
        %s1000 = sand.u32 %s271, 1
        %s1001 = scalar_lea.sflag [#allocation4], %s1000
        %s1002 = sand.u32 %s271, 1
        %s1003 = smul.addr %s1002, 8
        %s1004 = scalar_lea.vmem [#allocation8], %s1003
        // Predicated region
        $region77: #{tpu_custom_call.1} parent=63 // pred_check
          %p1005 = pneg %p281
        $region78: #{tpu_custom_call.1} parent=63 // pred_check_branch
          %1007 = sbr.rel (%p1005) target = $region80
        $region79: #{tpu_custom_call.1} parent=63 // pred_region
          %s1009 = ssub.s32 128, 128
          %1010 = vsyncadd %s1001, %s1009
          %s1011 = smul.addr %s27, 128
          %s1012 = scalar_lea.hbm %s11, %s1011
          %s1014 = sshll.u32 %s1004, 4
          %s1015 = int_to_ptr.vmem [resolvable:$true] %s1014
          %1017 = dma.vmem_to_hbm [thread:$0]  %s1015, 128, %s1012, %s1001
        $region80: #{tpu_custom_call.1} parent=63 // pred_fallthru
          _
      $region64: #{tpu_custom_call.1} parent=5 // pred_fallthru
        _
      %p1018 = scmp.le.s32.totalorder 2, %s22
      // Predicated region
      $region81: #{tpu_custom_call.1} parent=5 // pred_check
        %p1019 = pneg %p1018
      $region82: #{tpu_custom_call.1} parent=5 // pred_check_branch
        %1021 = sbr.rel (%p1019) target = $region84
      $region83: #{tpu_custom_call.1} parent=5 // pred_region
        %s1022 = ssub.s32 %s22, 2
        // Predicated region
        $region85: #{tpu_custom_call.1} parent=83 // pred_check
          %p1023 = pneg %p287
        $region86: #{tpu_custom_call.1} parent=83 // pred_check_branch
          %1025 = sbr.rel (%p1023) target = $region88
        $region87: #{tpu_custom_call.1} parent=83 // pred_region
          %s1026 = sand.u32 %s272, 1
          %s1027 = scalar_lea.sflag [#allocation4], %s1026
          %s1028 = sand.u32 %s272, 1
          %s1029 = smul.addr %s1028, 8
          %s1030 = scalar_lea.vmem [#allocation8], %s1029
          %1031 = dma.done %s1027, 128
        $region88: #{tpu_custom_call.1} parent=83 // pred_fallthru
          _
      $region84: #{tpu_custom_call.1} parent=5 // pred_fallthru
        _
    $region6: #{tpu_custom_call.1} parent=1 // loop_footer
      %s26 = sadd.s32 1, %s22
    $region7: #{tpu_custom_call.1} parent=1 // loop_footer_branch
      %21 = sbr.rel target = $region3
    $region8: #{tpu_custom_call.1} parent=1 // loop_exit
      _
    %1032 = vsyncpa [#allocation3], 1
    %s1033 = scalar_lea.sflag [#allocation3], 1
    %1034 = vsyncpa %s1033, 1
    %1035 = vsyncpa [#allocation6], 1
    %1036 = vsyncpa [#allocation4], 1
    %s1037 = scalar_lea.sflag [#allocation4], 1
    %1038 = vsyncpa %s1037, 1

</llo_original>
